<compile_context>
chip_gen: v7x
topology: tpu7x:2x2x1
jax: 0.10.0
libtpu: 0.0.40
codegen_flags: <defaults>
</compile_context>

<pallas_src>
import jax
import jax.numpy as jnp
from jax import lax
from jax.experimental import pallas as pl
from jax.experimental.pallas import tpu as pltpu

LAMDA1 = 0.1
LAMDA2 = 0.1
_NEG_PAD = -1e30  # finite "minus infinity": exp underflows to 0, no inf/NaN risk


def _f32(x):
    # Trace-time conditional upcast: a no-op for f32 inputs (no wasted VPU
    # convert pass), a real upcast only if callers feed bf16.
    return x if x.dtype == jnp.float32 else x.astype(jnp.float32)


def _pad_to(n, m):
    return ((n + m - 1) // m) * m


def _make_regloss_kernel(n_valid, n_classes, lamda1, lamda2):
    """Builds the fused loss kernel; all closure values are Python scalars."""
    n_valid = int(n_valid)
    n_classes = int(n_classes)
    lamda1 = float(lamda1)
    lamda2 = float(lamda2)
    neg = float(_NEG_PAD)  # plain Python float -> literal, not a captured array

    def kernel(x_ref, wa_ref, wt_ref, loss_ref):
        # ---- issue the MXU matmul first so its push/pop latency overlaps the
        #      VPU/EUP cross-entropy work below ----
        wt = _f32(wt_ref[...])                                    # (A, D)
        wa = _f32(wa_ref[...])                                    # (S, A)
        ws_seen = jnp.dot(wa, wt, preferred_element_type=jnp.float32)  # (S, D)
        # NOTE: ws_unseen = wa_unseen @ wt is dead code in the reference forward.

        # ---- cross entropy over the lane-dense padded logit block ----
        # x layout: columns [0, n_classes) = real logits,
        #           column  n_classes      = stashed target id (as f32),
        #           columns beyond         = -1e30 padding.
        x = _f32(x_ref[...])                                      # (N_pad, C_pad)
        col = lax.broadcasted_iota(jnp.int32, x.shape, 1)         # (N_pad, C_pad)

        # Recover stashed integer targets (exact for class ids < 2^24).
        tgt = jnp.sum(jnp.where(col == n_classes, x, 0.0),
                      axis=-1, keepdims=True)                     # (N_pad, 1) f32

        # Mask pad columns (incl. the stashed target column) out of the softmax.
        logits = jnp.where(col < n_classes, x, neg)
        m = jnp.max(logits, axis=-1, keepdims=True)               # (N_pad, 1)
        lse = jnp.log(jnp.sum(jnp.exp(logits - m),
                              axis=-1, keepdims=True)) + m        # (N_pad, 1)

        # Target-logit gather: select + row-sum (no one-hot cast/multiply).
        # NOTE: out-of-range target ids silently select 0 / padding instead of
        # erroring like torch.nn.CrossEntropyLoss.
        colf = col.astype(jnp.float32)
        tgt_logit = jnp.sum(jnp.where(colf == tgt, logits, 0.0),
                            axis=-1, keepdims=True)               # (N_pad, 1)

        # Padded rows contribute 0 to the batch-mean CE.
        row = lax.broadcasted_iota(jnp.int32, (x.shape[0], 1), 0)
        row_valid = (row < n_valid).astype(jnp.float32)
        ce = jnp.sum(row_valid * (lse - tgt_logit)) * (1.0 / n_valid)

        # ---- attribute regularizers ----
        reg_seen = jnp.sum(ws_seen * ws_seen) * (1.0 / ws_seen.size)  # mean(ws_seen**2)
        reg_wt = jnp.sum(wt * wt) * (1.0 / wt.size)                   # mean(wt**2)

        loss_ref[0, 0] = ce + lamda1 * reg_seen - lamda2 * reg_wt

    return kernel


@jax.jit
def reg_loss(out, targets, xt, wt, wa_seen):
    del xt  # unpacked but unused in the reference forward
    n, c = out.shape
    s, a = wa_seen.shape
    _, d = wt.shape

    # Lane-dense padding: last dim -> multiple of 128 (one extra lane stashes
    # the target id), rows -> multiple of 8 sublanes.
    n_pad = max(8, _pad_to(n, 8))
    c_pad = max(128, _pad_to(c + 1, 128))

    logits = out.astype(jnp.float32)
    tgt_col = targets.astype(jnp.float32).reshape(n, 1)
    merged = jnp.concatenate([logits, tgt_col], axis=1)           # (n, c+1)
    merged = jnp.pad(merged,
                     ((0, n_pad - n), (0, c_pad - (c + 1))),
                     constant_values=_NEG_PAD)                    # (n_pad, c_pad)

    kernel = _make_regloss_kernel(n, c, LAMDA1, LAMDA2)

    cost = pl.CostEstimate(
        flops=2 * s * a * d + 8 * n_pad * c_pad,
        transcendentals=n_pad * c_pad + n_pad,
        bytes_accessed=4 * (merged.size + wa_seen.size + wt.size + 1),
    )

    loss = pl.pallas_call(
        kernel,
        out_shape=jax.ShapeDtypeStruct((1, 1), jnp.float32),
        in_specs=[
            pl.BlockSpec(memory_space=pltpu.MemorySpace.VMEM),  # merged logits+targets
            pl.BlockSpec(memory_space=pltpu.MemorySpace.VMEM),  # wa_seen (S, A)
            pl.BlockSpec(memory_space=pltpu.MemorySpace.VMEM),  # wt      (A, D)
        ],
        out_specs=pl.BlockSpec(memory_space=pltpu.MemorySpace.SMEM),  # scalar loss
        cost_estimate=cost,
    )(merged, wa_seen, wt)
    return loss[0, 0]


if __name__ == "__main__":
    key = jax.random.PRNGKey(0)
    # Small shapes consistent with the module's forward (S == C):
    N, C = 8, 16                 # batch, num seen classes (logit width)
    S, U, A, D = 16, 8, 32, 64   # seen classes, unseen classes, attr dim, feature dim
    k1, k2, k3, k4, k5 = jax.random.split(key, 5)

    out = jax.random.normal(k1, (N, C), jnp.float32)
    targets = jax.random.randint(k2, (N,), 0, C, jnp.int32)
    xt = jax.random.normal(k3, (N, D), jnp.float32)          # unused, mirrors w = (xt, wt)
    wt = jax.random.normal(k4, (A, D), jnp.float32) * 0.1
    # TODO(synk): real attribute table comes from data/order_cub_attr.npy (/100); synthesized here.
    wa = jax.random.uniform(k5, (S + U, A), jnp.float32, 0.0, 100.0) / 100.0
    wa_seen = wa[:S, :]

    loss = reg_loss(out, targets, xt, wt, wa_seen)
    jax.block_until_ready(loss)

    # pure-JAX reference check
    logp = jax.nn.log_softmax(out, axis=-1)
    ce_ref = -jnp.mean(logp[jnp.arange(N), targets])
    ref = ce_ref + LAMDA1 * jnp.mean((wa_seen @ wt) ** 2) - LAMDA2 * jnp.mean(wt ** 2)
    assert jnp.allclose(loss, ref, rtol=1e-5, atol=1e-5), (loss, ref)

    print("KERNEL_OK")
</pallas_src>

<mosaic_0001>
module attributes {stable_mosaic.version = 11 : i64} {
  func.func @kernel(%arg0: memref<8x128xf32, #tpu.memory_space<vmem>>, %arg1: memref<16x32xf32, #tpu.memory_space<vmem>>, %arg2: memref<32x64xf32, #tpu.memory_space<vmem>>, %arg3: memref<1x1xf32, #tpu.memory_space<smem>>) attributes {dimension_semantics = [], scalar_prefetch = 0 : i64, scratch_operands = 0 : i64, tpu.core_type = #tpu.core_type<tc>} {
    %c0 = arith.constant 0 : index
    %c0_0 = arith.constant 0 : index
    %0 = vector.load %arg2[%c0, %c0_0] : memref<32x64xf32, #tpu.memory_space<vmem>>, vector<32x64xf32>
    %c0_1 = arith.constant 0 : index
    %c0_2 = arith.constant 0 : index
    %1 = vector.load %arg1[%c0_1, %c0_2] : memref<16x32xf32, #tpu.memory_space<vmem>>, vector<16x32xf32>
    %cst = arith.constant dense<0.000000e+00> : vector<16x64xf32>
    %2 = tpu.matmul %1, %0, %cst {dimension_numbers = #tpu.dot_dimension_numbers<[1], [0], [0], [1], [0, 0, 1, 1], [], []>} : vector<16x32xf32>, vector<32x64xf32>, vector<16x64xf32> -> vector<16x64xf32>
    %c0_3 = arith.constant 0 : index
    %c0_4 = arith.constant 0 : index
    %3 = vector.load %arg0[%c0_3, %c0_4] : memref<8x128xf32, #tpu.memory_space<vmem>>, vector<8x128xf32>
    %4 = tpu.iota {dimensions = array<i32: 1>} : vector<8x128xi32>
    %c16_i32 = arith.constant 16 : i32
    %5 = vector.broadcast %c16_i32 : i32 to vector<8x128xi32>
    %6 = arith.cmpi eq, %4, %5 : vector<8x128xi32>
    %cst_5 = arith.constant 0.000000e+00 : f32
    %7 = vector.broadcast %cst_5 : f32 to vector<8x128xf32>
    %8 = arith.select %6, %3, %7 : vector<8x128xi1>, vector<8x128xf32>
    %cst_6 = arith.constant dense<0.000000e+00> : vector<8xf32>
    %9 = vector.multi_reduction <add>, %8, %cst_6 [1] : vector<8x128xf32> to vector<8xf32>
    %10 = vector.shape_cast %9 : vector<8xf32> to vector<8x1xf32>
    %c16_i32_7 = arith.constant 16 : i32
    %11 = vector.broadcast %c16_i32_7 : i32 to vector<8x128xi32>
    %12 = arith.cmpi slt, %4, %11 : vector<8x128xi32>
    %cst_8 = arith.constant -1.000000e+30 : f32
    %13 = vector.broadcast %cst_8 : f32 to vector<8x128xf32>
    %14 = arith.select %12, %3, %13 : vector<8x128xi1>, vector<8x128xf32>
    %cst_9 = arith.constant dense<0xFF800000> : vector<8xf32>
    %15 = vector.multi_reduction <maximumf>, %14, %cst_9 [1] : vector<8x128xf32> to vector<8xf32>
    %16 = vector.shape_cast %15 : vector<8xf32> to vector<8x1xf32>
    %17 = vector.broadcast %16 : vector<8x1xf32> to vector<8x128xf32>
    %18 = arith.subf %14, %17 : vector<8x128xf32>
    %19 = math.exp %18 : vector<8x128xf32>
    %cst_10 = arith.constant dense<0.000000e+00> : vector<8xf32>
    %20 = vector.multi_reduction <add>, %19, %cst_10 [1] : vector<8x128xf32> to vector<8xf32>
    %21 = vector.shape_cast %20 : vector<8xf32> to vector<8x1xf32>
    %22 = math.log %21 : vector<8x1xf32>
    %23 = arith.addf %22, %16 : vector<8x1xf32>
    %24 = arith.sitofp %4 : vector<8x128xi32> to vector<8x128xf32>
    %25 = vector.broadcast %10 : vector<8x1xf32> to vector<8x128xf32>
    %26 = arith.cmpf oeq, %24, %25 : vector<8x128xf32>
    %cst_11 = arith.constant 0.000000e+00 : f32
    %27 = vector.broadcast %cst_11 : f32 to vector<8x128xf32>
    %28 = arith.select %26, %14, %27 : vector<8x128xi1>, vector<8x128xf32>
    %cst_12 = arith.constant dense<0.000000e+00> : vector<8xf32>
    %29 = vector.multi_reduction <add>, %28, %cst_12 [1] : vector<8x128xf32> to vector<8xf32>
    %30 = vector.shape_cast %29 : vector<8xf32> to vector<8x1xf32>
    %31 = tpu.iota {dimensions = array<i32: 0>} : vector<8x1xi32>
    %c8_i32 = arith.constant 8 : i32
    %32 = vector.broadcast %c8_i32 : i32 to vector<8x1xi32>
    %33 = arith.cmpi slt, %31, %32 : vector<8x1xi32>
    %34 = arith.extui %33 : vector<8x1xi1> to vector<8x1xi32>
    %35 = arith.sitofp %34 : vector<8x1xi32> to vector<8x1xf32>
    %36 = arith.subf %23, %30 : vector<8x1xf32>
    %37 = arith.mulf %35, %36 : vector<8x1xf32>
    %38 = vector.shape_cast %37 : vector<8x1xf32> to vector<1x8x1xf32>
    %cst_13 = arith.constant dense<0.000000e+00> : vector<1xf32>
    %39 = vector.multi_reduction <add>, %38, %cst_13 [1, 2] : vector<1x8x1xf32> to vector<1xf32>
    %40 = vector.shape_cast %39 : vector<1xf32> to vector<1x1x1xf32>
    %41 = vector.extract %40[0, 0, 0] : f32 from vector<1x1x1xf32>
    %cst_14 = arith.constant 1.250000e-01 : f32
    %42 = arith.mulf %41, %cst_14 : f32
    %43 = arith.mulf %2, %2 : vector<16x64xf32>
    %44 = vector.shape_cast %43 : vector<16x64xf32> to vector<1x16x64xf32>
    %cst_15 = arith.constant dense<0.000000e+00> : vector<1xf32>
    %45 = vector.multi_reduction <add>, %44, %cst_15 [1, 2] : vector<1x16x64xf32> to vector<1xf32>
    %46 = vector.shape_cast %45 : vector<1xf32> to vector<1x1x1xf32>
    %47 = vector.extract %46[0, 0, 0] : f32 from vector<1x1x1xf32>
    %cst_16 = arith.constant 9.765625E-4 : f32
    %48 = arith.mulf %47, %cst_16 : f32
    %49 = arith.mulf %0, %0 : vector<32x64xf32>
    %50 = vector.shape_cast %49 : vector<32x64xf32> to vector<1x32x64xf32>
    %cst_17 = arith.constant dense<0.000000e+00> : vector<1xf32>
    %51 = vector.multi_reduction <add>, %50, %cst_17 [1, 2] : vector<1x32x64xf32> to vector<1xf32>
    %52 = vector.shape_cast %51 : vector<1xf32> to vector<1x1x1xf32>
    %53 = vector.extract %52[0, 0, 0] : f32 from vector<1x1x1xf32>
    %cst_18 = arith.constant 4.8828125E-4 : f32
    %54 = arith.mulf %53, %cst_18 : f32
    %cst_19 = arith.constant 1.000000e-01 : f32
    %55 = arith.mulf %cst_19, %48 : f32
    %56 = arith.addf %42, %55 : f32
    %cst_20 = arith.constant 1.000000e-01 : f32
    %57 = arith.mulf %cst_20, %54 : f32
    %58 = arith.subf %56, %57 : f32
    %c0_21 = arith.constant 0 : index
    %c0_22 = arith.constant 0 : index
    %59 = memref.load %arg3[%c0_21, %c0_22] : memref<1x1xf32, #tpu.memory_space<smem>>
    memref.store %58, %arg3[%c0_21, %c0_22] : memref<1x1xf32, #tpu.memory_space<smem>>
    return
  }
}

</mosaic_0001>

<llo_original>
// kernel: reg_loss.1
$region0: #{reg_loss.1}
  #allocation0 [shape = 'u32[]', space=smem, size = 0x4, offset = 0x4, fixed_abs, tag = 'smem constant byte address 0x4 - core index']
  #allocation1 [shape = 'u32[144,128]{1,0:T(1,128)}', space=vmem, size = 0x12000, scoped, tag = 'internal scratch']
  %s0 = inlined_call_operand.vmem [shape: f32[8,128], index: 0, kind: input, shape index: {}]
  %s1 = inlined_call_operand.vmem [shape: f32[16,32], index: 1, kind: input, shape index: {}]
  %s2 = inlined_call_operand.vmem [shape: f32[32,64], index: 2, kind: input, shape index: {}]
  %s3 = inlined_call_operand.hbm [shape: f32[1,1], index: 3, kind: output, shape index: {}]
  %s4 = sld [smem:[#allocation0]]
  $region22: #{reg_loss.1} parent=0
    _
  %s6 = ssub.s32 1, %s4
  %s7 = scalar_select 0, %s6, %s4
  $region1: #{reg_loss.1} parent=0
    #allocation2 [shape = 'u8[512]{0}', space=smem, size = 0x200, scoped, tag = 'output window, operand 0, single buffered']
    #allocation3 [shape = 's32[1]{0}', space=sflag, size = 0x4, scoped, tag = 'scoped memory for reg_loss.1']
    %8 = vsyncpa [#allocation3], 0
    // Predicated region
    $region2: #{reg_loss.1} parent=1 // pred_check
      _
    $region3: #{reg_loss.1} parent=1 // pred_check_branch
      %10 = sbr.rel (0) target = $region5
    $region4: #{reg_loss.1} parent=1 // pred_region
      _
    $region5: #{reg_loss.1} parent=1 // pred_fallthru
      _
    // Predicated region
    $region6: #{reg_loss.1} parent=1 // pred_check
      _
    $region7: #{reg_loss.1} parent=1 // pred_check_branch
      %12 = sbr.rel (0) target = $region9
    $region8: #{reg_loss.1} parent=1 // pred_region
      _
    $region9: #{reg_loss.1} parent=1 // pred_fallthru
      _
    // Predicated region
    $region10: #{reg_loss.1} parent=1 // pred_check
      _
    $region11: #{reg_loss.1} parent=1 // pred_check_branch
      %14 = sbr.rel (0) target = $region13
    $region12: #{reg_loss.1} parent=1 // pred_region
      _
    $region13: #{reg_loss.1} parent=1 // pred_fallthru
      _
    %v15 = vld [vmem:[%s2] sm:$0xff]
    %v16 = vld [vmem:[%s2 + $0x8] sm:$0xff]
    %v17 = vld [vmem:[%s2 + $0x10] sm:$0xff]
    %v18 = vld [vmem:[%s2 + $0x18] sm:$0xff]
    %v19 = vld [vmem:[%s1] sm:$0xff]
    %v20 = vld [vmem:[%s1 + $0x8] sm:$0xff]
    %vm21 = vcmask 261120
    %v23 = vsel %vm21, %v19, 0
    %v26 = vsel %vm21, %v20, 0
    %28 = vmatprep.subr.mxu0 0.0
    %29 = vmatpush1.msra.mxu0 %v15
    %30 = vmatprep.subr.mxu0 0.0
    %31 = vmatpush1.msra.mxu0 %v16
    %32 = vmatprep.subr.mxu0 0.0
    %33 = vmatpush1.msra.mxu0 %v17
    %34 = vmatprep.subr.mxu0 0.0
    %35 = vmatpush1.msra.mxu0 %v18
    %36 = vmatprep.subr.mxu0 0.0
    %37 = vmatpush1.msra.mxu0 0.0
    %38 = vmatprep.subr.mxu0 0.0
    %39 = vmatpush1.msra.mxu0 0.0
    %40 = vmatprep.subr.mxu0 0.0
    %41 = vmatpush1.msra.mxu0 0.0
    %42 = vmatprep.subr.mxu0 0.0
    %43 = vmatpush1.msra.mxu0 0.0
    %44 = vmatprep.subr.mxu0 0.0
    %45 = vmatpush1.msra.mxu0 0.0
    %46 = vmatprep.subr.mxu0 0.0
    %47 = vmatpush1.msra.mxu0 0.0
    %48 = vmatprep.subr.mxu0 0.0
    %49 = vmatpush1.msra.mxu0 0.0
    %50 = vmatprep.subr.mxu0 0.0
    %51 = vmatpush1.msra.mxu0 0.0
    %52 = vmatprep.subr.mxu0 0.0
    %53 = vmatpush1.msra.mxu0 0.0
    %54 = vmatprep.subr.mxu0 0.0
    %55 = vmatpush1.msra.mxu0 0.0
    %56 = vmatprep.subr.mxu0 0.0
    %57 = vmatpush1.msra.mxu0 0.0
    %58 = vmatprep.subr.mxu0 0.0
    %59 = vmatpush1.msra.mxu0 0.0
    %60 = vmatprep.subr.mxu0 0.0
    %61 = vmatpush1.msra.mxu0 0.0
    %62 = vmatprep.subr.mxu0 0.0
    %63 = vmatpush1.msra.mxu0 0.0
    %64 = vmatprep.subr.mxu0 0.0
    %65 = vmatpush1.msra.mxu0 0.0
    %66 = vmatprep.subr.mxu0 0.0
    %67 = vmatpush1.msra.mxu0 0.0
    %68 = vmatprep.subr.mxu0 0.0
    %69 = vmatpush1.msra.mxu0 0.0
    %70 = vmatprep.subr.mxu0 0.0
    %71 = vmatpush1.msra.mxu0 0.0
    %72 = vmatprep.subr.mxu0 0.0
    %73 = vmatpush1.msra.mxu0 0.0
    %74 = vmatprep.subr.mxu0 0.0
    %75 = vmatpush1.msra.mxu0 0.0
    %76 = vmatprep.subr.mxu0 0.0
    %77 = vmatpush1.msra.mxu0 0.0
    %78 = vmatprep.subr.mxu0 0.0
    %79 = vmatpush1.msra.mxu0 0.0
    %80 = vmatprep.subr.mxu0 0.0
    %81 = vmatpush1.msra.mxu0 0.0
    %82 = vmatprep.subr.mxu0 0.0
    %83 = vmatpush1.msra.mxu0 0.0
    %84 = vmatprep.subr.mxu0 0.0
    %85 = vmatpush1.msra.mxu0 0.0
    %86 = vmatprep.subr.mxu0 0.0
    %87 = vmatpush1.msra.mxu0 0.0
    %88 = vmatprep.subr.mxu0 0.0
    %89 = vmatpush1.msra.mxu0 0.0
    %90 = vmatprep.subr.mxu0 0.0
    %91 = vmatpush1.msra.mxu0 0.0
    %92 = vmatprep.mubr.f32.mxu0 0.0
    %93 = vmatmul.mubr.f32.gmra.mrb[0].mxu0 %v23
    %v94 = vpop.f32.mrb[0].mxu0
    %v95 = vadd.f32 0.0, %v94
    %v96 = vpop.f32.mrb[0].mxu0
    %97 = vmatprep.mubr.f32.mxu0 0.0
    %98 = vmatmul.mubr.f32.gmra.mrb[0].mxu0 %v26
    %v99 = vpop.f32.mrb[0].mxu0
    %v100 = vadd.f32 0.0, %v99
    %v101 = vpop.f32.mrb[0].mxu0
    %102 = vdwg.mxu0
    %v103 = vld [vmem:[%s0] sm:$0xff]
    %v104 = vlaneseq
    %v105 = vand.u32 %v104, 127
    %vm106 = vcmp.eq.s32.totalorder %v105, 16
    %v107 = vsel %vm106, %v103, 0.0
    %108 = vadd.xlane.f32.xlu0 %v107
    %v109 = vpop.xlane.xlu0 %108
    %vm110 = vcmp.lt.s32.totalorder %v105, 16
    %v111 = vsel %vm110, %v103, -1e+30
    %112 = vmax.xlane.f32.xlu0 %v111
    %v113 = vpop.xlane.xlu0 %112
    %v114 = vsub.f32 %v111, %v113
    %v115 = vmul.f32 %v114, 1.442695
    %v116 = vpow.pop %v115
    %117 = vadd.xlane.f32.xlu0 %v116
    %v118 = vpop.xlane.xlu0 %117
    %v119 = vlog2.pop %v118
    %v120 = vmul.f32 %v119, 0.6931472
    %v121 = vadd.f32 %v120, %v113
    %v122 = vcvt.s32.f32 %v105
    %vm123 = vcmp.eq.f32.partialorder %v122, %v109
    %v124 = vsel %vm123, %v111, 0.0
    %125 = vadd.xlane.f32.xlu0 %v124
    %v126 = vpop.xlane.xlu0 %125
    %v127 = vlaneseq
    %v128 = vshrl.u32 %v127, 7
    %vm129 = vcmp.lt.s32.totalorder %v128, 8
    %v130 = vsel %vm129, 1, 0
    %v131 = vcvt.s32.f32 %v130
    %v132 = vsub.f32 %v121, %v126
    %v133 = vmul.f32 %v131, %v132
    %vm134 = vcmask 7168
    %v135 = vsel %vm134, %v133, 0.0
    %136 = vadd.xlane.f32.xlu0 %v135
    %v137 = vpop.xlane.xlu0 %136
    %v138 = vrot.slane %v137, 4
    %v139 = vadd.f32 %v137, %v138
    %v140 = vrot.slane %v139, 2
    %v141 = vadd.f32 %v139, %v140
    %v142 = vrot.slane %v141, 1
    %v143 = vadd.f32 %v141, %v142
    %s144 = vtos %v143
    %s145 = smul.f32 %s144, 0.125
    %v146 = vmul.f32 %v95, %v95
    %v147 = vmul.f32 %v100, %v100
    %vm148 = vcmask 523264
    %v149 = vsel %vm148, %v146, 0.0
    %v150 = vsel %vm148, %v147, 0.0
    %v151 = vadd.f32 %v149, %v150
    %152 = vadd.xlane.f32.xlu0 %v151
    %v153 = vpop.xlane.xlu0 %152
    %v154 = vrot.slane %v153, 4
    %v155 = vadd.f32 %v153, %v154
    %v156 = vrot.slane %v155, 2
    %v157 = vadd.f32 %v155, %v156
    %v158 = vrot.slane %v157, 1
    %v159 = vadd.f32 %v157, %v158
    %s160 = vtos %v159
    %s161 = smul.f32 %s160, 0.0009765625
    %v162 = vmul.f32 %v15, %v15
    %v163 = vmul.f32 %v16, %v16
    %v164 = vmul.f32 %v17, %v17
    %v165 = vmul.f32 %v18, %v18
    %v166 = vsel %vm148, %v162, 0.0
    %v167 = vsel %vm148, %v163, 0.0
    %v168 = vadd.f32 %v166, %v167
    %v169 = vsel %vm148, %v164, 0.0
    %v170 = vadd.f32 %v168, %v169
    %v171 = vsel %vm148, %v165, 0.0
    %v172 = vadd.f32 %v170, %v171
    %173 = vadd.xlane.f32.xlu0 %v172
    %v174 = vpop.xlane.xlu0 %173
    %v175 = vrot.slane %v174, 4
    %v176 = vadd.f32 %v174, %v175
    %v177 = vrot.slane %v176, 2
    %v178 = vadd.f32 %v176, %v177
    %v179 = vrot.slane %v178, 1
    %v180 = vadd.f32 %v178, %v179
    %s181 = vtos %v180
    %s182 = smul.f32 %s181, 0.00048828125
    %s183 = smul.f32 %s161, 0.1
    %s184 = sadd.f32 %s145, %s183
    %s185 = smul.f32 %s182, 0.1
    %s186 = ssub.f32 %s184, %s185
    %s187 = scalar_lea.smem [#allocation2], 0
    %188 = sst [smem:[%s187]] %s186
    // Predicated region
    $region14: #{reg_loss.1} parent=1 // pred_check
      _
    $region15: #{reg_loss.1} parent=1 // pred_check_branch
      %190 = sbr.rel (0) target = $region17
    $region16: #{reg_loss.1} parent=1 // pred_region
      %s192 = ssub.s32 16, 16
      %193 = vsyncadd [#allocation3], %s192
      %196 = dma.smem_to_hbm [#allocation2], 16, %s3, [#allocation3]
    $region17: #{reg_loss.1} parent=1 // pred_fallthru
      _
    // Predicated region
    $region18: #{reg_loss.1} parent=1 // pred_check
      _
    $region19: #{reg_loss.1} parent=1 // pred_check_branch
      %198 = sbr.rel (0) target = $region21
    $region20: #{reg_loss.1} parent=1 // pred_region
      %199 = dma.done [#allocation3], 16
    $region21: #{reg_loss.1} parent=1 // pred_fallthru
      _
    %200 = sfence
    %201 = vsyncpa [#allocation3], 1

</llo_original>
